<compile_context>
chip_gen: v6e
topology: v6e:2x2x1
jax: 0.10.0
libtpu: 0.0.40
codegen_flags: <defaults>
</compile_context>

<pallas_src>
import functools

import jax
import jax.numpy as jnp
from jax.experimental import pallas as pl
from jax.experimental.pallas import tpu as pltpu

RRELU_EVAL_SLOPE = (1.0 / 8.0 + 1.0 / 3.0) / 2.0  # nn.RReLU() default, eval mode
LANE = 128


def _round_up(v, m):
    return (v + m - 1) // m * m


def _pad2(a, rows, cols):
    return jnp.pad(a, ((0, rows - a.shape[0]), (0, cols - a.shape[1])))


# ---------------------------------------------------------------------------
# Pass 1: fused x-LHS matmul   xW = x @ [W1 | W2 | W4]  (+ fused biases)
#   -> s1    = x @ W1                       (bf16, feeds adj @ s1)
#   -> skips = [x@W2 + b1+b2 | x@W4 + b3+b4] (f32 epilogue terms)
# ---------------------------------------------------------------------------
def _fused_xw_kernel(x_ref, w_ref, b_ref, s1_ref, skips_ref, *, hpad):
    xw = jnp.dot(x_ref[...], w_ref[...],
                 preferred_element_type=jnp.float32) + b_ref[...]
    s1_ref[...] = xw[:, :hpad].astype(s1_ref.dtype)
    skips_ref[...] = xw[:, hpad:]


# ---------------------------------------------------------------------------
# Pass 2: s3 = RReLU(adj @ s1 + skip_a) @ W3, K-accumulated over adj columns.
# ---------------------------------------------------------------------------
def _gc_layer1_kernel(adj_ref, s1_ref, skipa_ref, w3_ref, s3_ref, acc_ref):
    k = pl.program_id(1)

    @pl.when(k == 0)
    def _():
        acc_ref[...] = jnp.zeros_like(acc_ref)

    acc_ref[...] += jnp.dot(adj_ref[...], s1_ref[...],
                            preferred_element_type=jnp.float32)

    @pl.when(k == pl.num_programs(1) - 1)
    def _():
        pre = acc_ref[...] + skipa_ref[...]
        h = jnp.where(pre >= 0, pre, pre * RRELU_EVAL_SLOPE)
        s3_ref[...] = jnp.dot(h.astype(w3_ref.dtype), w3_ref[...],
                              preferred_element_type=jnp.float32
                              ).astype(s3_ref.dtype)


# ---------------------------------------------------------------------------
# Pass 3: out = adj @ s3 + skip_b, K-accumulated over adj columns.
# ---------------------------------------------------------------------------
def _gc_layer2_kernel(adj_ref, s3_ref, skipb_ref, out_ref, acc_ref):
    k = pl.program_id(1)

    @pl.when(k == 0)
    def _():
        acc_ref[...] = jnp.zeros_like(acc_ref)

    acc_ref[...] += jnp.dot(adj_ref[...], s3_ref[...],
                            preferred_element_type=jnp.float32)

    @pl.when(k == pl.num_programs(1) - 1)
    def _():
        out_ref[...] = (acc_ref[...] + skipb_ref[...]).astype(out_ref.dtype)


def gcn_forward(x, adj, params, *, tm=128, tk=128):
    """Full GCN forward as three row/K-tiled Pallas kernels."""
    w1, b1, w2, b2, w3, b3, w4, b4 = params
    n, nfeat = x.shape
    nhid = w1.shape[1]
    nclass = w3.shape[1]

    hp = _round_up(nhid, LANE)      # padded hidden width (lane-dense)
    cp = _round_up(nclass, LANE)    # padded class width (lane-dense)
    np_ = _round_up(n, max(tm, tk))  # padded node count (tile-aligned)

    bf16 = jnp.bfloat16
    x_p = _pad2(x, np_, nfeat).astype(bf16)
    adj_p = _pad2(adj, np_, np_).astype(bf16)

    # Fused x-LHS weight block [W1 | W2 | W4] with fused biases [0 | b1+b2 | b3+b4].
    w_fused = jnp.concatenate(
        [_pad2(w1, nfeat, hp), _pad2(w2, nfeat, hp), _pad2(w4, nfeat, cp)],
        axis=1).astype(bf16)
    b_fused = jnp.concatenate([
        jnp.zeros((hp,), jnp.float32),
        jnp.pad(b1 + b2, (0, hp - nhid)),
        jnp.pad(b3 + b4, (0, cp - nclass)),
    ]).reshape(1, -1)
    w3_p = _pad2(w3, hp, cp).astype(bf16)

    wtot = 2 * hp + cp

    # ---- pass 1: one wide matmul over all x-LHS branches, row-tiled ---------
    s1, skips = pl.pallas_call(
        functools.partial(_fused_xw_kernel, hpad=hp),
        grid=(np_ // tm,),
        in_specs=[
            pl.BlockSpec((tm, nfeat), lambda i: (i, 0)),
            pl.BlockSpec((nfeat, wtot), lambda i: (0, 0)),
            pl.BlockSpec((1, wtot), lambda i: (0, 0)),
        ],
        out_specs=[
            pl.BlockSpec((tm, hp), lambda i: (i, 0)),
            pl.BlockSpec((tm, hp + cp), lambda i: (i, 0)),
        ],
        out_shape=[
            jax.ShapeDtypeStruct((np_, hp), bf16),
            jax.ShapeDtypeStruct((np_, hp + cp), jnp.float32),
        ],
        compiler_params=pltpu.CompilerParams(
            dimension_semantics=("parallel",)),
    )(x_p, w_fused, b_fused)

    skip_a = skips[:, :hp]   # x@W2 + b1 + b2  (f32)
    skip_b = skips[:, hp:]   # x@W4 + b3 + b4  (f32)

    grid2 = (np_ // tm, np_ // tk)

    # ---- pass 2: s3 = RReLU(adj @ s1 + skip_a) @ W3 --------------------------
    s3 = pl.pallas_call(
        _gc_layer1_kernel,
        grid=grid2,
        in_specs=[
            pl.BlockSpec((tm, tk), lambda i, k: (i, k)),
            pl.BlockSpec((tk, hp), lambda i, k: (k, 0)),
            pl.BlockSpec((tm, hp), lambda i, k: (i, 0)),
            pl.BlockSpec((hp, cp), lambda i, k: (0, 0)),
        ],
        out_specs=pl.BlockSpec((tm, cp), lambda i, k: (i, 0)),
        out_shape=jax.ShapeDtypeStruct((np_, cp), bf16),
        scratch_shapes=[pltpu.VMEM((tm, hp), jnp.float32)],
        compiler_params=pltpu.CompilerParams(
            dimension_semantics=("parallel", "arbitrary")),
    )(adj_p, s1, skip_a, w3_p)

    # ---- pass 3: out = adj @ s3 + skip_b -------------------------------------
    out_p = pl.pallas_call(
        _gc_layer2_kernel,
        grid=grid2,
        in_specs=[
            pl.BlockSpec((tm, tk), lambda i, k: (i, k)),
            pl.BlockSpec((tk, cp), lambda i, k: (k, 0)),
            pl.BlockSpec((tm, cp), lambda i, k: (i, 0)),
        ],
        out_specs=pl.BlockSpec((tm, cp), lambda i, k: (i, 0)),
        out_shape=jax.ShapeDtypeStruct((np_, cp), jnp.float32),
        scratch_shapes=[pltpu.VMEM((tm, cp), jnp.float32)],
        compiler_params=pltpu.CompilerParams(
            dimension_semantics=("parallel", "arbitrary")),
    )(adj_p, s3, skip_b)

    out = out_p[:n, :nclass]
    # Module also returns the (unmodified) layer weights.
    return out, w1, w2, w3, w4


def init_params(key, nfeat, nhid, nclass):
    """Deterministic pygcn-style init: U(-1/sqrt(out), 1/sqrt(out))."""
    ks = jax.random.split(key, 8)

    def layer(kw, kb, fin, fout):
        stdv = 1.0 / jnp.sqrt(jnp.float32(fout))
        w = jax.random.uniform(kw, (fin, fout), jnp.float32, -stdv, stdv)
        b = jax.random.uniform(kb, (fout,), jnp.float32, -stdv, stdv)
        return w, b

    w1, b1 = layer(ks[0], ks[1], nfeat, nhid)    # gc1
    w2, b2 = layer(ks[2], ks[3], nfeat, nhid)    # gc2
    w3, b3 = layer(ks[4], ks[5], nhid, nclass)   # gc3
    w4, b4 = layer(ks[6], ks[7], nfeat, nclass)  # gc4
    return (w1, b1, w2, b2, w3, b3, w4, b4)


def _reference_f32(x, adj, params):
    """Pure-JAX f32 reference of the module semantics."""
    w1, b1, w2, b2, w3, b3, w4, b4 = params
    skip0 = x @ w2 + b2
    skip1 = x @ w4 + b4
    pre = adj @ (x @ w1) + b1 + skip0
    h = jnp.where(pre >= 0, pre, pre * RRELU_EVAL_SLOPE)
    return adj @ (h @ w3) + b3 + skip1


def _reference_bf16(x, adj, params):
    """Reference mirroring the kernel's precision: bf16 operands / intermediates,
    f32 accumulation, f32 bias + activation math."""
    w1, b1, w2, b2, w3, b3, w4, b4 = params
    bf = jnp.bfloat16
    dot = lambda a, b: jnp.dot(a, b, preferred_element_type=jnp.float32)
    xb, ab = x.astype(bf), adj.astype(bf)
    s1 = dot(xb, w1.astype(bf)).astype(bf)
    skip_a = dot(xb, w2.astype(bf)) + (b1 + b2)
    skip_b = dot(xb, w4.astype(bf)) + (b3 + b4)
    pre = dot(ab, s1) + skip_a
    h = jnp.where(pre >= 0, pre, pre * RRELU_EVAL_SLOPE)
    s3 = dot(h.astype(bf), w3.astype(bf)).astype(bf)
    return dot(ab, s3) + skip_b


if __name__ == "__main__":
    key = jax.random.PRNGKey(0)
    k_x, k_a, k_p = jax.random.split(key, 3)

    # Small but tiling-exercising shapes (N pads 200 -> 256 => 2x2 grid).
    N, nfeat, nhid, nclass = 200, 64, 32, 8
    x = jax.random.normal(k_x, (N, nfeat), jnp.float32)

    # Dense row-normalized adjacency with self-loops (deterministic).
    a = (jax.random.uniform(k_a, (N, N)) > 0.9).astype(jnp.float32)
    a = jnp.clip(a + a.T + jnp.eye(N, dtype=jnp.float32), 0.0, 1.0)
    adj = a / jnp.sum(a, axis=1, keepdims=True)

    params = init_params(k_p, nfeat, nhid, nclass)

    out, w1, w2, w3, w4 = gcn_forward(x, adj, params)
    out = jax.block_until_ready(out)
    assert out.shape == (N, nclass)

    # Tight check vs. a precision-matched (bf16 operand / f32 accum) reference.
    ref_bf = _reference_bf16(x, adj, params)
    assert jnp.allclose(out, ref_bf, atol=2e-3, rtol=2e-3), (
        float(jnp.max(jnp.abs(out - ref_bf))))

    # Loose semantic check vs. the pure f32 reference (bf16 rounding tolerance).
    ref_f32 = _reference_f32(x, adj, params)
    assert jnp.allclose(out, ref_f32, atol=1e-1, rtol=1e-1), (
        float(jnp.max(jnp.abs(out - ref_f32))))

    print("KERNEL_OK")
</pallas_src>

<mosaic_0001>
module attributes {stable_mosaic.version = 11 : i64} {
  func.func @_fused_xw_kernel(%arg0: i32, %arg1: memref<128x64xbf16, #tpu.memory_space<vmem>>, %arg2: memref<64x384xbf16, #tpu.memory_space<vmem>>, %arg3: memref<1x384xf32, #tpu.memory_space<vmem>>, %arg4: memref<128x128xbf16, #tpu.memory_space<vmem>>, %arg5: memref<128x256xf32, #tpu.memory_space<vmem>>) attributes {dimension_semantics = [#tpu.dimension_semantics<parallel>], iteration_bounds = array<i64: 2>, scalar_prefetch = 0 : i64, scratch_operands = 0 : i64, tpu.core_type = #tpu.core_type<tc>, window_params = [{transform_indices = @transform_0, window_bounds = array<i64: 128, 64>}, {pipeline_mode = #tpu.pipeline_mode<synchronous>, transform_indices = @transform_1, window_bounds = array<i64: 64, 384>}, {pipeline_mode = #tpu.pipeline_mode<synchronous>, transform_indices = @transform_2, window_bounds = array<i64: 1, 384>}, {transform_indices = @transform_3, window_bounds = array<i64: 128, 128>}, {transform_indices = @transform_4, window_bounds = array<i64: 128, 256>}]} {
    %c0 = arith.constant 0 : index
    %c0_0 = arith.constant 0 : index
    %0 = vector.load %arg1[%c0, %c0_0] : memref<128x64xbf16, #tpu.memory_space<vmem>>, vector<128x64xbf16>
    %c0_1 = arith.constant 0 : index
    %c0_2 = arith.constant 0 : index
    %1 = vector.load %arg2[%c0_1, %c0_2] : memref<64x384xbf16, #tpu.memory_space<vmem>>, vector<64x384xbf16>
    %cst = arith.constant dense<0.000000e+00> : vector<128x384xf32>
    %2 = tpu.matmul %0, %1, %cst {dimension_numbers = #tpu.dot_dimension_numbers<[1], [0], [0], [1], [0, 0, 1, 1], [], []>} : vector<128x64xbf16>, vector<64x384xbf16>, vector<128x384xf32> -> vector<128x384xf32>
    %c0_3 = arith.constant 0 : index
    %c0_4 = arith.constant 0 : index
    %3 = vector.load %arg3[%c0_3, %c0_4] : memref<1x384xf32, #tpu.memory_space<vmem>>, vector<1x384xf32>
    %4 = vector.broadcast %3 : vector<1x384xf32> to vector<128x384xf32>
    %5 = arith.addf %2, %4 : vector<128x384xf32>
    %6 = vector.extract_strided_slice %5 {offsets = [0, 0], sizes = [128, 128], strides = [1, 1]} : vector<128x384xf32> to vector<128x128xf32>
    %7 = arith.truncf %6 : vector<128x128xf32> to vector<128x128xbf16>
    %c0_5 = arith.constant 0 : index
    %c0_6 = arith.constant 0 : index
    %8 = vector.load %arg4[%c0_5, %c0_6] : memref<128x128xbf16, #tpu.memory_space<vmem>>, vector<128x128xbf16>
    tpu.vector_store %arg4[%c0_5, %c0_6], %7 {strides = array<i32>} : memref<128x128xbf16, #tpu.memory_space<vmem>>, vector<128x128xbf16>,
    %9 = vector.extract_strided_slice %5 {offsets = [0, 128], sizes = [128, 256], strides = [1, 1]} : vector<128x384xf32> to vector<128x256xf32>
    %c0_7 = arith.constant 0 : index
    %c0_8 = arith.constant 0 : index
    %10 = vector.load %arg5[%c0_7, %c0_8] : memref<128x256xf32, #tpu.memory_space<vmem>>, vector<128x256xf32>
    tpu.vector_store %arg5[%c0_7, %c0_8], %9 {strides = array<i32>} : memref<128x256xf32, #tpu.memory_space<vmem>>, vector<128x256xf32>,
    return
  }
  func.func @transform_0(%arg0: i32) -> (i32, i32) {
    %c0_i32 = arith.constant 0 : i32
    %c0_i32_0 = arith.constant 0 : i32
    return %arg0, %c0_i32 : i32, i32
  }
  func.func @transform_1(%arg0: i32) -> (i32, i32) {
    %c0_i32 = arith.constant 0 : i32
    %c0_i32_0 = arith.constant 0 : i32
    %c0_i32_1 = arith.constant 0 : i32
    return %c0_i32, %c0_i32_0 : i32, i32
  }
  func.func @transform_2(%arg0: i32) -> (i32, i32) {
    %c0_i32 = arith.constant 0 : i32
    %c0_i32_0 = arith.constant 0 : i32
    %c0_i32_1 = arith.constant 0 : i32
    return %c0_i32, %c0_i32_0 : i32, i32
  }
  func.func @transform_3(%arg0: i32) -> (i32, i32) {
    %c0_i32 = arith.constant 0 : i32
    %c0_i32_0 = arith.constant 0 : i32
    return %arg0, %c0_i32 : i32, i32
  }
  func.func @transform_4(%arg0: i32) -> (i32, i32) {
    %c0_i32 = arith.constant 0 : i32
    %c0_i32_0 = arith.constant 0 : i32
    return %arg0, %c0_i32 : i32, i32
  }
}

</mosaic_0001>

<llo_original>
// kernel: tpu_custom_call.1
$region0: #{tpu_custom_call.1}
  #allocation0 [shape = 'u32[]', space=smem, size = 0x4, offset = 0x4, fixed_abs, tag = 'smem constant byte address 0x4 - core index']
  #allocation1 [shape = 'u32[144,128]{1,0:T(1,128)}', space=vmem, size = 0x12000, scoped, tag = 'internal scratch']
  %s0 = inlined_call_operand.vmem [shape: bf16[256,64], index: 0, kind: input, shape index: {}]
  %s1 = inlined_call_operand.vmem [shape: bf16[64,384], index: 1, kind: input, shape index: {}]
  %s2 = inlined_call_operand.vmem [shape: f32[1,384], index: 2, kind: input, shape index: {}]
  %s3 = inlined_call_operand.hbm [shape: bf16[256,128], index: 3, kind: output, shape index: {0}]
  %s4 = inlined_call_operand.hbm [shape: f32[256,256], index: 4, kind: output, shape index: {1}]
  %5 = xla_tuple %s3, %s4
  %s6 = sld [smem:[#allocation0]]
  $region53: #{tpu_custom_call.1} parent=0
    _
  %s8 = ssub.s32 1, %s6
  %s9 = scalar_select 0, %s8, %s6
  $region1: #{tpu_custom_call.1} parent=0
    #allocation2 [shape = 'u8[65536]{0}', space=vmem, size = 0x10000, scoped, tag = 'output window, operand 0']
    #allocation3 [shape = 's32[2]{0}', space=sflag, size = 0x8, scoped, tag = 'scoped memory for tpu_custom_call.1']
    #allocation4 [shape = 'u8[262144]{0}', space=vmem, size = 0x40000, scoped, tag = 'output window, operand 1']
    #allocation5 [shape = 's32[2]{0}', space=sflag, size = 0x8, scoped, tag = 'scoped memory for tpu_custom_call.1']
    %10 = vsyncpa [#allocation3], 0
    %s11 = scalar_lea.sflag [#allocation3], 1
    %12 = vsyncpa %s11, 0
    %13 = vsyncpa [#allocation5], 0
    %s14 = scalar_lea.sflag [#allocation5], 1
    %15 = vsyncpa %s14, 0
    loop: start=0, step=1, limit=4
    $region2: #{tpu_custom_call.1} parent=1 // loop_pre_header
      _
    $region3: #{tpu_custom_call.1} parent=1 // loop_header
      %s17 = sphi 0, %s21
      %p18 = scmp.ge.s32.totalorder %s17, 4
      %s27 = sphi 0, %s29
      %s30 = sphi 0, %s27
      %s31 = sphi 0, %s30
      %s47 = sphi 0, %s31
      %s51 = sphi 0, %s51
      %s53 = sphi 0, %s51
      %s54 = sphi 0, %s53
      %s68 = sphi 0, %s54
      %s72 = sphi 0, %s72
      %s74 = sphi 0, %s72
      %s75 = sphi 0, %s74
      %s89 = sphi 0, %s75
      %s95 = sphi 0, %s97
      %s98 = sphi 0, %s95
      %s99 = sphi 0, %s98
      %s115 = sphi 0, %s99
      %s121 = sphi 0, %s123
      %s124 = sphi 0, %s121
      %s125 = sphi 0, %s124
      %s141 = sphi 0, %s125
    $region4: #{tpu_custom_call.1} parent=1 // loop_header_branch
      %20 = sbr.rel (%p18) target = $region8
    $region5: #{tpu_custom_call.1} parent=1 // loop_body
      %s22 = ssub.s32 %s17, 1
      %s23 = ssub.s32 %s17, 2
      %s24 = sadd.s32 %s17, 1
      %s25 = ssub.s32 %s17, %s24
      %p26 = scmp.eq.s32.totalorder %s25, 0
      %s28 = sadd.s32 %s27, 1
      %s29 = scalar_select %p26, %s27, %s28
      %p32 = pneg %p26
      %p33 = scmp.eq.s32.totalorder %s17, 1
      %p34 = por %p32, %p33
      %p35 = scmp.ne.s32.totalorder %s27, %s30
      %p36 = scmp.eq.s32.totalorder %s17, 0
      %p37 = por %p35, %p36
      %p38 = scmp.ne.s32.totalorder %s27, %s30
      %p39 = scmp.eq.s32.totalorder %s22, 1
      %p40 = por %p38, %p39
      %p41 = scmp.ne.s32.totalorder %s30, %s31
      %p42 = scmp.eq.s32.totalorder %s22, 0
      %p43 = por %p41, %p42
      %p44 = scmp.ne.s32.totalorder %s30, %s31
      %p45 = scmp.eq.s32.totalorder %s23, 1
      %p46 = por %p44, %p45
      %p48 = scmp.ne.s32.totalorder %s31, %s47
      %p49 = scmp.eq.s32.totalorder %s23, 0
      %p50 = por %p48, %p49
      %s52 = sadd.s32 %s51, 1
      %p55 = scmp.eq.s32.totalorder %s17, 1
      %p56 = scmp.ne.s32.totalorder %s51, %s53
      %p57 = scmp.eq.s32.totalorder %s17, 0
      %p58 = por %p56, %p57
      %p59 = scmp.ne.s32.totalorder %s51, %s53
      %p60 = scmp.eq.s32.totalorder %s22, 1
      %p61 = por %p59, %p60
      %p62 = scmp.ne.s32.totalorder %s53, %s54
      %p63 = scmp.eq.s32.totalorder %s22, 0
      %p64 = por %p62, %p63
      %p65 = scmp.ne.s32.totalorder %s53, %s54
      %p66 = scmp.eq.s32.totalorder %s23, 1
      %p67 = por %p65, %p66
      %p69 = scmp.ne.s32.totalorder %s54, %s68
      %p70 = scmp.eq.s32.totalorder %s23, 0
      %p71 = por %p69, %p70
      %s73 = sadd.s32 %s72, 1
      %p76 = scmp.eq.s32.totalorder %s17, 1
      %p77 = scmp.ne.s32.totalorder %s72, %s74
      %p78 = scmp.eq.s32.totalorder %s17, 0
      %p79 = por %p77, %p78
      %p80 = scmp.ne.s32.totalorder %s72, %s74
      %p81 = scmp.eq.s32.totalorder %s22, 1
      %p82 = por %p80, %p81
      %p83 = scmp.ne.s32.totalorder %s74, %s75
      %p84 = scmp.eq.s32.totalorder %s22, 0
      %p85 = por %p83, %p84
      %p86 = scmp.ne.s32.totalorder %s74, %s75
      %p87 = scmp.eq.s32.totalorder %s23, 1
      %p88 = por %p86, %p87
      %p90 = scmp.ne.s32.totalorder %s75, %s89
      %p91 = scmp.eq.s32.totalorder %s23, 0
      %p92 = por %p90, %p91
      %s93 = ssub.s32 %s17, %s24
      %p94 = scmp.eq.s32.totalorder %s93, 0
      %s96 = sadd.s32 %s95, 1
      %s97 = scalar_select %p94, %s95, %s96
      %p100 = pneg %p94
      %p101 = scmp.eq.s32.totalorder %s17, 1
      %p102 = por %p100, %p101
      %p103 = scmp.ne.s32.totalorder %s95, %s98
      %p104 = scmp.eq.s32.totalorder %s17, 0
      %p105 = por %p103, %p104
      %p106 = scmp.ne.s32.totalorder %s95, %s98
      %p107 = scmp.eq.s32.totalorder %s22, 1
      %p108 = por %p106, %p107
      %p109 = scmp.ne.s32.totalorder %s98, %s99
      %p110 = scmp.eq.s32.totalorder %s22, 0
      %p111 = por %p109, %p110
      %p112 = scmp.ne.s32.totalorder %s98, %s99
      %p113 = scmp.eq.s32.totalorder %s23, 1
      %p114 = por %p112, %p113
      %p116 = scmp.ne.s32.totalorder %s99, %s115
      %p117 = scmp.eq.s32.totalorder %s23, 0
      %p118 = por %p116, %p117
      %s119 = ssub.s32 %s17, %s24
      %p120 = scmp.eq.s32.totalorder %s119, 0
      %s122 = sadd.s32 %s121, 1
      %s123 = scalar_select %p120, %s121, %s122
      %p126 = pneg %p120
      %p127 = scmp.eq.s32.totalorder %s17, 1
      %p128 = por %p126, %p127
      %p129 = scmp.ne.s32.totalorder %s121, %s124
      %p130 = scmp.eq.s32.totalorder %s17, 0
      %p131 = por %p129, %p130
      %p132 = scmp.ne.s32.totalorder %s121, %s124
      %p133 = scmp.eq.s32.totalorder %s22, 1
      %p134 = por %p132, %p133
      %p135 = scmp.ne.s32.totalorder %s124, %s125
      %p136 = scmp.eq.s32.totalorder %s22, 0
      %p137 = por %p135, %p136
      %p138 = scmp.ne.s32.totalorder %s124, %s125
      %p139 = scmp.eq.s32.totalorder %s23, 1
      %p140 = por %p138, %p139
      %p142 = scmp.ne.s32.totalorder %s125, %s141
      %p143 = scmp.eq.s32.totalorder %s23, 0
      %p144 = por %p142, %p143
      %p145 = scmp.le.s32.totalorder 1, %s17
      %p146 = scmp.lt.s32.totalorder %s17, 3
      %p147 = pnand %p145, %p146
      %p148 = pneg %p147
      // Predicated region
      $region9: #{tpu_custom_call.1} parent=5 // pred_check
        _
      $region10: #{tpu_custom_call.1} parent=5 // pred_check_branch
        %150 = sbr.rel (%p147) target = $region12
      $region11: #{tpu_custom_call.1} parent=5 // pred_region
        %s151 = ssub.s32 %s17, 1
        // Predicated region
        $region13: #{tpu_custom_call.1} parent=11 // pred_check
          %p152 = pneg %p64
        $region14: #{tpu_custom_call.1} parent=11 // pred_check_branch
          %154 = sbr.rel (%p152) target = $region16
        $region15: #{tpu_custom_call.1} parent=11 // pred_region
          _
        $region16: #{tpu_custom_call.1} parent=11 // pred_fallthru
          _
        // Predicated region
        $region17: #{tpu_custom_call.1} parent=11 // pred_check
          %p155 = pneg %p85
        $region18: #{tpu_custom_call.1} parent=11 // pred_check_branch
          %157 = sbr.rel (%p155) target = $region20
        $region19: #{tpu_custom_call.1} parent=11 // pred_region
          _
        $region20: #{tpu_custom_call.1} parent=11 // pred_fallthru
          _
      $region12: #{tpu_custom_call.1} parent=5 // pred_fallthru
        _
      %p158 = scmp.lt.s32.totalorder %s17, 2
      // Predicated region
      $region21: #{tpu_custom_call.1} parent=5 // pred_check
        %p159 = pneg %p158
      $region22: #{tpu_custom_call.1} parent=5 // pred_check_branch
        %161 = sbr.rel (%p159) target = $region24
      $region23: #{tpu_custom_call.1} parent=5 // pred_region
        // Predicated region
        $region25: #{tpu_custom_call.1} parent=23 // pred_check
          %p162 = pneg %p37
        $region26: #{tpu_custom_call.1} parent=23 // pred_check_branch
          %164 = sbr.rel (%p162) target = $region28
        $region27: #{tpu_custom_call.1} parent=23 // pred_region
          %s165 = smul.u32 16, %s17
          %p166 = scmp.lt.s32.totalorder %s165, 31
          %s167 = scalar_select %p166, %s165, 31
          %s168 = smul.addr %s167, 4
          %s169 = scalar_lea.vmem %s0, %s168
          %s170 = smul.u32 16, %s17
        $region28: #{tpu_custom_call.1} parent=23 // pred_fallthru
          _
      $region24: #{tpu_custom_call.1} parent=5 // pred_fallthru
        _
      %p171 = scmp.le.s32.totalorder 1, %s17
      %p172 = scmp.lt.s32.totalorder %s17, 3
      %p173 = pnand %p171, %p172
      %p174 = pneg %p173
      // Predicated region
      $region29: #{tpu_custom_call.1} parent=5 // pred_check
        _
      $region30: #{tpu_custom_call.1} parent=5 // pred_check_branch
        %176 = sbr.rel (%p173) target = $region32
      $region31: #{tpu_custom_call.1} parent=5 // pred_region
        %s177 = ssub.s32 %s17, 1
        %s178 = smul.u32 16, %s22
        %p179 = scmp.lt.s32.totalorder %s178, 31
        %s180 = scalar_select %p179, %s178, 31
        %s181 = smul.addr %s180, 4
        %s182 = scalar_lea.vmem %s0, %s181
        %p183 = pneg %p43
        %p184 = pneg %p40
        %p185 = pneg %p64
        %p186 = pneg %p61
        %p187 = pneg %p85
        %p188 = pneg %p82
        %p189 = pneg %p111
        %p190 = pneg %p108
        %s191 = sand.u32 %s98, 1
        %s192 = scalar_lea.sflag [#allocation3], %s191
        %s193 = sand.u32 %s98, 1
        %s194 = smul.addr %s193, 64
        %s195 = scalar_lea.vmem [#allocation2], %s194
        %p196 = pneg %p137
        %p197 = pneg %p134
        %s198 = sand.u32 %s124, 1
        %s199 = scalar_lea.sflag [#allocation5], %s198
        %s200 = sand.u32 %s124, 1
        %s201 = smul.addr %s200, 256
        %s202 = scalar_lea.vmem [#allocation4], %s201
        %s203 = smul.u32 16, %s22
        %p204 = scmp.lt.s32.totalorder %s203, 31
        %s205 = scalar_select %p204, %s203, 31
        %s206 = smul.addr %s205, 4
        %s207 = scalar_lea.vmem %s0, %s206
        %s208 = smul.u32 16, %s22
        %s209 = smul.u32 16, %s22
        %s210 = smul.u32 16, %s22
        %v212 = vld [vmem:[%s207] sm:$0xf]
        %v213 = vld [vmem:[%s207 + $0x4] sm:$0xf]
        %v214 = vld [vmem:[%s207 + $0x8] sm:$0xf]
        %v215 = vld [vmem:[%s207 + $0xc] sm:$0xf]
        %v216 = vld [vmem:[%s207 + $0x10] sm:$0xf]
        %v217 = vld [vmem:[%s207 + $0x14] sm:$0xf]
        %v218 = vld [vmem:[%s207 + $0x18] sm:$0xf]
        %v219 = vld [vmem:[%s207 + $0x1c] sm:$0xf]
        %v220 = vld [vmem:[%s207 + $0x20] sm:$0xf]
        %v221 = vld [vmem:[%s207 + $0x24] sm:$0xf]
        %v222 = vld [vmem:[%s207 + $0x28] sm:$0xf]
        %v223 = vld [vmem:[%s207 + $0x2c] sm:$0xf]
        %v224 = vld [vmem:[%s207 + $0x30] sm:$0xf]
        %v225 = vld [vmem:[%s207 + $0x34] sm:$0xf]
        %v226 = vld [vmem:[%s207 + $0x38] sm:$0xf]
        %v227 = vld [vmem:[%s207 + $0x3c] sm:$0xf]
        %v228 = vld [vmem:[%s1] sm:$0xff]
        %v229 = vld [vmem:[%s1 + $0x8] sm:$0xf]
        %v230 = vld [vmem:[%s1 + $0xc] sm:$0xff]
        %v231 = vld [vmem:[%s1 + $0x14] sm:$0xf]
        %v232 = vld [vmem:[%s1 + $0x18] sm:$0xff]
        %v233 = vld [vmem:[%s1 + $0x20] sm:$0xf]
        %v234 = vld [vmem:[%s1 + $0x24] sm:$0xff]
        %v235 = vld [vmem:[%s1 + $0x2c] sm:$0xf]
        %v236 = vld [vmem:[%s1 + $0x30] sm:$0xff]
        %v237 = vld [vmem:[%s1 + $0x38] sm:$0xf]
        %v238 = vld [vmem:[%s1 + $0x3c] sm:$0xff]
        %v239 = vld [vmem:[%s1 + $0x44] sm:$0xf]
        %v240 = vld [vmem:[%s1 + $0x48] sm:$0xff]
        %v241 = vld [vmem:[%s1 + $0x50] sm:$0xf]
        %v242 = vld [vmem:[%s1 + $0x54] sm:$0xff]
        %v243 = vld [vmem:[%s1 + $0x5c] sm:$0xf]
        %v244 = vld [vmem:[%s2] sm:$0x7]
        %v246 = vlaneseq
        %v247 = vshrl.u32 %v246, 7
        %v248 = vsub.s32 0, %v247
        %v249 = vrot.slane %v244, %v248
        %v250 = vlaneseq
        %v251 = vshrl.u32 %v250, 7
        %v252 = vsub.s32 1, %v251
        %v253 = vrot.slane %v244, %v252
        %v254 = vlaneseq
        %v255 = vshrl.u32 %v254, 7
        %v256 = vsub.s32 2, %v255
        %v257 = vrot.slane %v244, %v256
        %v277 = vunpack.c.l.b16 %v212
        %v278 = vunpack.c.l.b16 %v213
        %v279 = vunpack.c.l.b16 %v214
        %v280 = vunpack.c.l.b16 %v215
        %v281 = vunpack.c.l.b16 %v216
        %v282 = vunpack.c.l.b16 %v217
        %v283 = vunpack.c.l.b16 %v218
        %v284 = vunpack.c.l.b16 %v219
        %v285 = vunpack.c.l.b16 %v220
        %v286 = vunpack.c.l.b16 %v221
        %v287 = vunpack.c.l.b16 %v222
        %v288 = vunpack.c.l.b16 %v223
        %v289 = vunpack.c.l.b16 %v224
        %v290 = vunpack.c.l.b16 %v225
        %v291 = vunpack.c.l.b16 %v226
        %v292 = vunpack.c.l.b16 %v227
        %v293 = vpack.c.b16 %v278, %v277
        %v294 = vpack.c.b16 %v280, %v279
        %v295 = vpack.c.b16 %v282, %v281
        %v296 = vpack.c.b16 %v284, %v283
        %v297 = vpack.c.b16 %v286, %v285
        %v298 = vpack.c.b16 %v288, %v287
        %v299 = vpack.c.b16 %v290, %v289
        %v300 = vpack.c.b16 %v292, %v291
        %v317 = vunpack.c.l.b16 %v228
        %v318 = vunpack.c.h.b16 %v228
        %v319 = vunpack.c.l.b16 %v229
        %v320 = vunpack.c.l.b16 %v230
        %v321 = vunpack.c.h.b16 %v230
        %v322 = vunpack.c.l.b16 %v231
        %v323 = vunpack.c.l.b16 %v232
        %v324 = vunpack.c.h.b16 %v232
        %v325 = vunpack.c.l.b16 %v233
        %v326 = vunpack.c.l.b16 %v234
        %v327 = vunpack.c.h.b16 %v234
        %v328 = vunpack.c.l.b16 %v235
        %v329 = vunpack.c.l.b16 %v236
        %v330 = vunpack.c.h.b16 %v236
        %v331 = vunpack.c.l.b16 %v237
        %v332 = vunpack.c.l.b16 %v238
        %v333 = vunpack.c.h.b16 %v238
        %v334 = vunpack.c.l.b16 %v239
        %v335 = vunpack.c.l.b16 %v240
        %v336 = vunpack.c.h.b16 %v240
        %v337 = vunpack.c.l.b16 %v241
        %v338 = vunpack.c.l.b16 %v242
        %v339 = vunpack.c.h.b16 %v242
        %v340 = vunpack.c.l.b16 %v243
        %v341 = vpack.c.b16 %v320, %v317
        %v342 = vpack.c.b16 %v321, %v318
        %v343 = vpack.c.b16 %v322, %v319
        %v344 = vpack.c.b16 %v326, %v323
        %v345 = vpack.c.b16 %v327, %v324
        %v346 = vpack.c.b16 %v328, %v325
        %v347 = vpack.c.b16 %v332, %v329
        %v348 = vpack.c.b16 %v333, %v330
        %v349 = vpack.c.b16 %v334, %v331
        %v350 = vpack.c.b16 %v338, %v335
        %v351 = vpack.c.b16 %v339, %v336
        %v352 = vpack.c.b16 %v340, %v337
        %vm365 = vcmask 523264
        %v367 = vsel %vm365, %v293, 0
        %v370 = vsel %vm365, %v294, 0
        %v373 = vsel %vm365, %v295, 0
        %v376 = vsel %vm365, %v296, 0
        %v379 = vsel %vm365, %v297, 0
        %v382 = vsel %vm365, %v298, 0
        %v385 = vsel %vm365, %v299, 0
        %v388 = vsel %vm365, %v300, 0
        %390 = vmatprep.subr.bf16.mxu0 0
        %391 = vmatpush1.bf16.msra.mxu0 0
        %392 = vmatprep.subr.bf16.mxu0 0
        %393 = vmatpush1.bf16.msra.mxu0 0
        %394 = vmatprep.subr.bf16.mxu0 0
        %395 = vmatpush1.bf16.msra.mxu0 0
        %396 = vmatprep.subr.bf16.mxu0 0
        %397 = vmatpush1.bf16.msra.mxu0 0
        %398 = vmatprep.subr.bf16.mxu0 %v351
        %399 = vmatpush1.bf16.msra.mxu0 %v350
        %400 = vmatprep.subr.bf16.mxu0 %v348
        %401 = vmatpush1.bf16.msra.mxu0 %v347
        %402 = vmatprep.subr.bf16.mxu0 %v345
        %403 = vmatpush1.bf16.msra.mxu0 %v344
        %404 = vmatprep.subr.bf16.mxu0 %v342
        %405 = vmatpush1.bf16.msra.mxu0 %v341
        %406 = vmatprep.subr.bf16.mxu0 0
        %407 = vmatpush2.bf16.msra.mxu0 0
        %408 = vmatprep.subr.bf16.mxu0 0
        %409 = vmatpush2.bf16.msra.mxu0 0
        %410 = vmatprep.subr.bf16.mxu0 0
        %411 = vmatpush2.bf16.msra.mxu0 0
        %412 = vmatprep.subr.bf16.mxu0 0
        %413 = vmatpush2.bf16.msra.mxu0 0
        %414 = vmatprep.subr.bf16.mxu0 0
        %415 = vmatpush2.bf16.msra.mxu0 0
        %416 = vmatprep.subr.bf16.mxu0 0
        %417 = vmatpush2.bf16.msra.mxu0 0
        %418 = vmatprep.subr.bf16.mxu0 0
        %419 = vmatpush2.bf16.msra.mxu0 0
        %420 = vmatprep.subr.bf16.mxu0 0
        %421 = vmatpush2.bf16.msra.mxu0 0
        %422 = vmatprep.mubr.bf16.mxu0 0
        %423 = vmatmul.mubr.bf16.gmra.mxu0 %v367
        %v424 = vpop.f32.mrf.mxu0
        %v425 = vadd.f32 %v249, %v424
        %v426 = vpop.f32.mrf.mxu0
        %v427 = vadd.f32 %v253, %v426
        %v428 = vpop.f32.mrf.mxu0
        %v429 = vadd.f32 %v249, %v428
        %v430 = vpop.f32.mrf.mxu0
        %v431 = vadd.f32 %v253, %v430
        %432 = vmatprep.mubr.bf16.mxu0 0
        %433 = vmatmul.mubr.bf16.gmra.mxu0 %v370
        %v434 = vpop.f32.mrf.mxu0
        %v435 = vadd.f32 %v249, %v434
        %v436 = vpop.f32.mrf.mxu0
        %v437 = vadd.f32 %v253, %v436
        %v438 = vpop.f32.mrf.mxu0
        %v439 = vadd.f32 %v249, %v438
        %v440 = vpop.f32.mrf.mxu0
        %v441 = vadd.f32 %v253, %v440
        %442 = vmatprep.mubr.bf16.mxu0 0
        %443 = vmatmul.mubr.bf16.gmra.mxu0 %v373
        %v444 = vpop.f32.mrf.mxu0
        %v445 = vadd.f32 %v249, %v444
        %v446 = vpop.f32.mrf.mxu0
        %v447 = vadd.f32 %v253, %v446
        %v448 = vpop.f32.mrf.mxu0
        %v449 = vadd.f32 %v249, %v448
        %v450 = vpop.f32.mrf.mxu0
        %v451 = vadd.f32 %v253, %v450
        %452 = vmatprep.mubr.bf16.mxu0 0
        %453 = vmatmul.mubr.bf16.gmra.mxu0 %v376
        %v454 = vpop.f32.mrf.mxu0
        %v455 = vadd.f32 %v249, %v454
        %v456 = vpop.f32.mrf.mxu0
        %v457 = vadd.f32 %v253, %v456
        %v458 = vpop.f32.mrf.mxu0
        %v459 = vadd.f32 %v249, %v458
        %v460 = vpop.f32.mrf.mxu0
        %v461 = vadd.f32 %v253, %v460
        %462 = vmatprep.mubr.bf16.mxu0 0
        %463 = vmatmul.mubr.bf16.gmra.mxu0 %v379
        %v464 = vpop.f32.mrf.mxu0
        %v465 = vadd.f32 %v249, %v464
        %v466 = vpop.f32.mrf.mxu0
        %v467 = vadd.f32 %v253, %v466
        %v468 = vpop.f32.mrf.mxu0
        %v469 = vadd.f32 %v249, %v468
        %v470 = vpop.f32.mrf.mxu0
        %v471 = vadd.f32 %v253, %v470
        %472 = vmatprep.mubr.bf16.mxu0 0
        %473 = vmatmul.mubr.bf16.gmra.mxu0 %v382
        %v474 = vpop.f32.mrf.mxu0
        %v475 = vadd.f32 %v249, %v474
        %v476 = vpop.f32.mrf.mxu0
        %v477 = vadd.f32 %v253, %v476
        %v478 = vpop.f32.mrf.mxu0
        %v479 = vadd.f32 %v249, %v478
        %v480 = vpop.f32.mrf.mxu0
        %v481 = vadd.f32 %v253, %v480
        %482 = vmatprep.mubr.bf16.mxu0 0
        %483 = vmatmul.mubr.bf16.gmra.mxu0 %v385
        %v484 = vpop.f32.mrf.mxu0
        %v485 = vadd.f32 %v249, %v484
        %v486 = vpop.f32.mrf.mxu0
        %v487 = vadd.f32 %v253, %v486
        %v488 = vpop.f32.mrf.mxu0
        %v489 = vadd.f32 %v249, %v488
        %v490 = vpop.f32.mrf.mxu0
        %v491 = vadd.f32 %v253, %v490
        %492 = vmatprep.mubr.bf16.mxu0 0
        %493 = vmatmul.mubr.bf16.gmra.mxu0 %v388
        %v494 = vpop.f32.mrf.mxu0
        %v495 = vadd.f32 %v249, %v494
        %v496 = vpop.f32.mrf.mxu0
        %v497 = vadd.f32 %v253, %v496
        %v498 = vpop.f32.mrf.mxu0
        %v499 = vadd.f32 %v249, %v498
        %v500 = vpop.f32.mrf.mxu0
        %v501 = vadd.f32 %v253, %v500
        %502 = vdwg.mxu0
        %503 = vmatprep.subr.bf16.mxu0 0
        %504 = vmatpush1.bf16.msra.mxu0 0
        %505 = vmatprep.subr.bf16.mxu0 0
        %506 = vmatpush1.bf16.msra.mxu0 0
        %507 = vmatprep.subr.bf16.mxu0 0
        %508 = vmatpush1.bf16.msra.mxu0 0
        %509 = vmatprep.subr.bf16.mxu0 0
        %510 = vmatpush1.bf16.msra.mxu0 0
        %511 = vmatprep.subr.bf16.mxu0 0
        %512 = vmatpush1.bf16.msra.mxu0 %v352
        %513 = vmatprep.subr.bf16.mxu0 0
        %514 = vmatpush1.bf16.msra.mxu0 %v349
        %515 = vmatprep.subr.bf16.mxu0 0
        %516 = vmatpush1.bf16.msra.mxu0 %v346
        %517 = vmatprep.subr.bf16.mxu0 0
        %518 = vmatpush1.bf16.msra.mxu0 %v343
        %519 = vmatprep.subr.bf16.mxu0 0
        %520 = vmatpush2.bf16.msra.mxu0 0
        %521 = vmatprep.subr.bf16.mxu0 0
        %522 = vmatpush2.bf16.msra.mxu0 0
        %523 = vmatprep.subr.bf16.mxu0 0
        %524 = vmatpush2.bf16.msra.mxu0 0
        %525 = vmatprep.subr.bf16.mxu0 0
        %526 = vmatpush2.bf16.msra.mxu0 0
        %527 = vmatprep.subr.bf16.mxu0 0
        %528 = vmatpush2.bf16.msra.mxu0 0
        %529 = vmatprep.subr.bf16.mxu0 0
        %530 = vmatpush2.bf16.msra.mxu0 0
        %531 = vmatprep.subr.bf16.mxu0 0
        %532 = vmatpush2.bf16.msra.mxu0 0
        %533 = vmatprep.subr.bf16.mxu0 0
        %534 = vmatpush2.bf16.msra.mxu0 0
        %535 = vmatprep.mubr.bf16.mxu0 0
        %536 = vmatmul.mubr.bf16.gmra.mxu0 %v367
        %v537 = vpop.f32.mrf.mxu0
        %v538 = vadd.f32 %v257, %v537
        %v539 = vpop.f32.mrf.mxu0
        %v540 = vpop.f32.mrf.mxu0
        %v541 = vadd.f32 %v257, %v540
        %v542 = vpop.f32.mrf.mxu0
        %543 = vmatprep.mubr.bf16.mxu0 0
        %544 = vmatmul.mubr.bf16.gmra.mxu0 %v370
        %v545 = vpop.f32.mrf.mxu0
        %v546 = vadd.f32 %v257, %v545
        %v547 = vpop.f32.mrf.mxu0
        %v548 = vpop.f32.mrf.mxu0
        %v549 = vadd.f32 %v257, %v548
        %v550 = vpop.f32.mrf.mxu0
        %551 = vmatprep.mubr.bf16.mxu0 0
        %552 = vmatmul.mubr.bf16.gmra.mxu0 %v373
        %v553 = vpop.f32.mrf.mxu0
        %v554 = vadd.f32 %v257, %v553
        %v555 = vpop.f32.mrf.mxu0
        %v556 = vpop.f32.mrf.mxu0
        %v557 = vadd.f32 %v257, %v556
        %v558 = vpop.f32.mrf.mxu0
        %559 = vmatprep.mubr.bf16.mxu0 0
        %560 = vmatmul.mubr.bf16.gmra.mxu0 %v376
        %v561 = vpop.f32.mrf.mxu0
        %v562 = vadd.f32 %v257, %v561
        %v563 = vpop.f32.mrf.mxu0
        %v564 = vpop.f32.mrf.mxu0
        %v565 = vadd.f32 %v257, %v564
        %v566 = vpop.f32.mrf.mxu0
        %567 = vmatprep.mubr.bf16.mxu0 0
        %568 = vmatmul.mubr.bf16.gmra.mxu0 %v379
        %v569 = vpop.f32.mrf.mxu0
        %v570 = vadd.f32 %v257, %v569
        %v571 = vpop.f32.mrf.mxu0
        %v572 = vpop.f32.mrf.mxu0
        %v573 = vadd.f32 %v257, %v572
        %v574 = vpop.f32.mrf.mxu0
        %575 = vmatprep.mubr.bf16.mxu0 0
        %576 = vmatmul.mubr.bf16.gmra.mxu0 %v382
        %v577 = vpop.f32.mrf.mxu0
        %v578 = vadd.f32 %v257, %v577
        %v579 = vpop.f32.mrf.mxu0
        %v580 = vpop.f32.mrf.mxu0
        %v581 = vadd.f32 %v257, %v580
        %v582 = vpop.f32.mrf.mxu0
        %583 = vmatprep.mubr.bf16.mxu0 0
        %584 = vmatmul.mubr.bf16.gmra.mxu0 %v385
        %v585 = vpop.f32.mrf.mxu0
        %v586 = vadd.f32 %v257, %v585
        %v587 = vpop.f32.mrf.mxu0
        %v588 = vpop.f32.mrf.mxu0
        %v589 = vadd.f32 %v257, %v588
        %v590 = vpop.f32.mrf.mxu0
        %591 = vmatprep.mubr.bf16.mxu0 0
        %592 = vmatmul.mubr.bf16.gmra.mxu0 %v388
        %v593 = vpop.f32.mrf.mxu0
        %v594 = vadd.f32 %v257, %v593
        %v595 = vpop.f32.mrf.mxu0
        %v596 = vpop.f32.mrf.mxu0
        %v597 = vadd.f32 %v257, %v596
        %v598 = vpop.f32.mrf.mxu0
        %599 = vdwg.mxu0
        %v600 = vpack.c.bf16 %v429, %v425
        %v601 = vpack.c.bf16 %v439, %v435
        %v602 = vpack.c.bf16 %v449, %v445
        %v603 = vpack.c.bf16 %v459, %v455
        %v604 = vpack.c.bf16 %v469, %v465
        %v605 = vpack.c.bf16 %v479, %v475
        %v606 = vpack.c.bf16 %v489, %v485
        %v607 = vpack.c.bf16 %v499, %v495
        %v616 = vunpack.c.l.b16 %v600
        %v617 = vunpack.c.h.b16 %v600
        %v618 = vunpack.c.l.b16 %v601
        %v619 = vunpack.c.h.b16 %v601
        %v620 = vunpack.c.l.b16 %v602
        %v621 = vunpack.c.h.b16 %v602
        %v622 = vunpack.c.l.b16 %v603
        %v623 = vunpack.c.h.b16 %v603
        %v624 = vunpack.c.l.b16 %v604
        %v625 = vunpack.c.h.b16 %v604
        %v626 = vunpack.c.l.b16 %v605
        %v627 = vunpack.c.h.b16 %v605
        %v628 = vunpack.c.l.b16 %v606
        %v629 = vunpack.c.h.b16 %v606
        %v630 = vunpack.c.l.b16 %v607
        %v631 = vunpack.c.h.b16 %v607
        %v632 = vpack.c.b16 %v616, %v616
        %v633 = vpack.c.b16 %v617, %v617
        %v634 = vpack.c.b16 %v618, %v618
        %v635 = vpack.c.b16 %v619, %v619
        %v636 = vpack.c.b16 %v620, %v620
        %v637 = vpack.c.b16 %v621, %v621
        %v638 = vpack.c.b16 %v622, %v622
        %v639 = vpack.c.b16 %v623, %v623
        %v640 = vpack.c.b16 %v624, %v624
        %v641 = vpack.c.b16 %v625, %v625
        %v642 = vpack.c.b16 %v626, %v626
        %v643 = vpack.c.b16 %v627, %v627
        %v644 = vpack.c.b16 %v628, %v628
        %v645 = vpack.c.b16 %v629, %v629
        %v646 = vpack.c.b16 %v630, %v630
        %v647 = vpack.c.b16 %v631, %v631
        %664 = vst [vmem:[%s195] sm:$0xf] %v632
        %665 = vst [vmem:[%s195 + $0x4] sm:$0xf] %v633
        %666 = vst [vmem:[%s195 + $0x8] sm:$0xf] %v634
        %667 = vst [vmem:[%s195 + $0xc] sm:$0xf] %v635
        %668 = vst [vmem:[%s195 + $0x10] sm:$0xf] %v636
        %669 = vst [vmem:[%s195 + $0x14] sm:$0xf] %v637
        %670 = vst [vmem:[%s195 + $0x18] sm:$0xf] %v638
        %671 = vst [vmem:[%s195 + $0x1c] sm:$0xf] %v639
        %672 = vst [vmem:[%s195 + $0x20] sm:$0xf] %v640
        %673 = vst [vmem:[%s195 + $0x24] sm:$0xf] %v641
        %674 = vst [vmem:[%s195 + $0x28] sm:$0xf] %v642
        %675 = vst [vmem:[%s195 + $0x2c] sm:$0xf] %v643
        %676 = vst [vmem:[%s195 + $0x30] sm:$0xf] %v644
        %677 = vst [vmem:[%s195 + $0x34] sm:$0xf] %v645
        %678 = vst [vmem:[%s195 + $0x38] sm:$0xf] %v646
        %679 = vst [vmem:[%s195 + $0x3c] sm:$0xf] %v647
        %680 = vst [vmem:[%s202] sm:$0xff] %v427
        %681 = vst [vmem:[%s202 + $0x8] sm:$0xff] %v538
        %682 = vst [vmem:[%s202 + $0x10] sm:$0xff] %v431
        %683 = vst [vmem:[%s202 + $0x18] sm:$0xff] %v541
        %684 = vst [vmem:[%s202 + $0x20] sm:$0xff] %v437
        %685 = vst [vmem:[%s202 + $0x28] sm:$0xff] %v546
        %686 = vst [vmem:[%s202 + $0x30] sm:$0xff] %v441
        %687 = vst [vmem:[%s202 + $0x38] sm:$0xff] %v549
        %688 = vst [vmem:[%s202 + $0x40] sm:$0xff] %v447
        %689 = vst [vmem:[%s202 + $0x48] sm:$0xff] %v554
        %690 = vst [vmem:[%s202 + $0x50] sm:$0xff] %v451
        %691 = vst [vmem:[%s202 + $0x58] sm:$0xff] %v557
        %692 = vst [vmem:[%s202 + $0x60] sm:$0xff] %v457
        %693 = vst [vmem:[%s202 + $0x68] sm:$0xff] %v562
        %694 = vst [vmem:[%s202 + $0x70] sm:$0xff] %v461
        %695 = vst [vmem:[%s202 + $0x78] sm:$0xff] %v565
        %696 = vst [vmem:[%s202 + $0x80] sm:$0xff] %v467
        %697 = vst [vmem:[%s202 + $0x88] sm:$0xff] %v570
        %698 = vst [vmem:[%s202 + $0x90] sm:$0xff] %v471
        %699 = vst [vmem:[%s202 + $0x98] sm:$0xff] %v573
        %700 = vst [vmem:[%s202 + $0xa0] sm:$0xff] %v477
        %701 = vst [vmem:[%s202 + $0xa8] sm:$0xff] %v578
        %702 = vst [vmem:[%s202 + $0xb0] sm:$0xff] %v481
        %703 = vst [vmem:[%s202 + $0xb8] sm:$0xff] %v581
        %704 = vst [vmem:[%s202 + $0xc0] sm:$0xff] %v487
        %705 = vst [vmem:[%s202 + $0xc8] sm:$0xff] %v586
        %706 = vst [vmem:[%s202 + $0xd0] sm:$0xff] %v491
        %707 = vst [vmem:[%s202 + $0xd8] sm:$0xff] %v589
        %708 = vst [vmem:[%s202 + $0xe0] sm:$0xff] %v497
        %709 = vst [vmem:[%s202 + $0xe8] sm:$0xff] %v594
        %710 = vst [vmem:[%s202 + $0xf0] sm:$0xff] %v501
        %711 = vst [vmem:[%s202 + $0xf8] sm:$0xff] %v597
        %s712 = sand.u32 %s98, 1
        %s713 = scalar_lea.sflag [#allocation3], %s712
        %s714 = sand.u32 %s98, 1
        %s715 = smul.addr %s714, 64
        %s716 = scalar_lea.vmem [#allocation2], %s715
        %s717 = sand.u32 %s124, 1
        %s718 = scalar_lea.sflag [#allocation5], %s717
        %s719 = sand.u32 %s124, 1
        %s720 = smul.addr %s719, 256
        %s721 = scalar_lea.vmem [#allocation4], %s720
        // Predicated region
        $region33: #{tpu_custom_call.1} parent=31 // pred_check
          %p722 = pneg %p108
        $region34: #{tpu_custom_call.1} parent=31 // pred_check_branch
          %724 = sbr.rel (%p722) target = $region36
        $region35: #{tpu_custom_call.1} parent=31 // pred_region
          %s725 = smul.u32 16, %s22
          %s727 = ssub.s32 1024, 1024
          %728 = vsyncadd %s713, %s727
          %s729 = smul.addr %s725, 64
          %s730 = scalar_lea.hbm %s3, %s729
          %s731 = sshll.u32 %s716, 4
          %s732 = int_to_ptr.vmem [resolvable:$true] %s731
          %737 = dma.vmem_to_hbm [thread:$0]  %s732, 1024, %s730, %s713, 64, 64, 4
        $region36: #{tpu_custom_call.1} parent=31 // pred_fallthru
          _
        // Predicated region
        $region37: #{tpu_custom_call.1} parent=31 // pred_check
          %p738 = pneg %p134
        $region38: #{tpu_custom_call.1} parent=31 // pred_check_branch
          %740 = sbr.rel (%p738) target = $region40
        $region39: #{tpu_custom_call.1} parent=31 // pred_region
          %s741 = smul.u32 16, %s22
          %s743 = ssub.s32 4096, 4096
          %744 = vsyncadd %s718, %s743
          %s745 = smul.addr %s741, 2
          %s746 = smul.addr %s745, 128
          %s747 = scalar_lea.hbm %s4, %s746
          %s748 = sshll.u32 %s721, 4
          %s749 = int_to_ptr.vmem [resolvable:$true] %s748
          %754 = dma.vmem_to_hbm [thread:$0]  %s749, 4096, %s747, %s718, 256, 256, 16
        $region40: #{tpu_custom_call.1} parent=31 // pred_fallthru
          _
      $region32: #{tpu_custom_call.1} parent=5 // pred_fallthru
        _
      %p755 = scmp.le.s32.totalorder 2, %s17
      // Predicated region
      $region41: #{tpu_custom_call.1} parent=5 // pred_check
        %p756 = pneg %p755
      $region42: #{tpu_custom_call.1} parent=5 // pred_check_branch
        %758 = sbr.rel (%p756) target = $region44
      $region43: #{tpu_custom_call.1} parent=5 // pred_region
        %s759 = ssub.s32 %s17, 2
        // Predicated region
        $region45: #{tpu_custom_call.1} parent=43 // pred_check
          %p760 = pneg %p114
        $region46: #{tpu_custom_call.1} parent=43 // pred_check_branch
          %762 = sbr.rel (%p760) target = $region48
        $region47: #{tpu_custom_call.1} parent=43 // pred_region
          %s763 = sand.u32 %s99, 1
          %s764 = scalar_lea.sflag [#allocation3], %s763
          %s765 = sand.u32 %s99, 1
          %s766 = smul.addr %s765, 64
          %s767 = scalar_lea.vmem [#allocation2], %s766
          %768 = dma.done %s764, 1024
        $region48: #{tpu_custom_call.1} parent=43 // pred_fallthru
          _
        // Predicated region
        $region49: #{tpu_custom_call.1} parent=43 // pred_check
          %p769 = pneg %p140
        $region50: #{tpu_custom_call.1} parent=43 // pred_check_branch
          %771 = sbr.rel (%p769) target = $region52
        $region51: #{tpu_custom_call.1} parent=43 // pred_region
          %s772 = sand.u32 %s125, 1
          %s773 = scalar_lea.sflag [#allocation5], %s772
          %s774 = sand.u32 %s125, 1
          %s775 = smul.addr %s774, 256
          %s776 = scalar_lea.vmem [#allocation4], %s775
          %777 = dma.done %s773, 4096
        $region52: #{tpu_custom_call.1} parent=43 // pred_fallthru
          _
      $region44: #{tpu_custom_call.1} parent=5 // pred_fallthru
        _
    $region6: #{tpu_custom_call.1} parent=1 // loop_footer
      %s21 = sadd.s32 1, %s17
    $region7: #{tpu_custom_call.1} parent=1 // loop_footer_branch
      %16 = sbr.rel target = $region3
    $region8: #{tpu_custom_call.1} parent=1 // loop_exit
      _
    %778 = vsyncpa [#allocation3], 1
    %s779 = scalar_lea.sflag [#allocation3], 1
    %780 = vsyncpa %s779, 1
    %781 = vsyncpa [#allocation5], 1
    %s782 = scalar_lea.sflag [#allocation5], 1
    %783 = vsyncpa %s782, 1

</llo_original>
